<compile_context>
chip_gen: v7x
topology: tpu7x:2x2x1
jax: 0.10.0
libtpu: 0.0.40
codegen_flags: <defaults>
</compile_context>

<pallas_src>
import functools

import jax
import jax.numpy as jnp
from jax.experimental import pallas as pl
from jax.experimental.pallas import tpu as pltpu


def _round_up(n, m):
    return ((n + m - 1) // m) * m


def _mlp_kernel(x_ref, w1_ref, b1_ref, w2_ref, b2_ref, out_ref):
    # hidden = tanh(x @ W1 + b1): MXU feed in the weight dtype, f32 accumulate,
    # f32 bias + tanh.  The cast happens in VMEM (no extra HBM pass).
    a = x_ref[...].astype(w1_ref.dtype)
    h = jnp.dot(a, w1_ref[...], preferred_element_type=jnp.float32)
    h = jnp.tanh(h + b1_ref[...])
    # out = hidden @ W2 + b2
    y = jnp.dot(h.astype(w2_ref.dtype), w2_ref[...],
                preferred_element_type=jnp.float32)
    out_ref[...] = (y + b2_ref[...]).astype(out_ref.dtype)


def prepare_params(w1, b1, w2, b2, compute_dtype=jnp.float32):
    """One-time layout transform of PyTorch nn.Linear params.

    PyTorch layout: w1 (D1, D0), b1 (D1,), w2 (D2, D1), b2 (D2,)  [(out, in)].
    Returns arrays only (safe to pass straight into the jitted forward):
      w1t: (D0, D1p)  transposed, hidden dim zero-padded to a multiple of 128
      b1p: (1,  D1p)  f32, zero-padded
      w2t: (D1p, D2)  transposed, padded rows are zero; D2 kept unpadded
      b2p: (1,  D2)   f32
    Do this ONCE at init -- not per forward call.
    """
    D1, D0 = w1.shape
    D2, D1b = w2.shape
    assert D1b == D1
    D1p = _round_up(D1, 128)
    cdt = jnp.dtype(compute_dtype)
    w1t = jnp.zeros((D0, D1p), cdt).at[:, :D1].set(jnp.transpose(w1).astype(cdt))
    w2t = jnp.zeros((D1p, D2), cdt).at[:D1, :].set(jnp.transpose(w2).astype(cdt))
    b1p = jnp.zeros((1, D1p), jnp.float32).at[:, :D1].set(
        b1.astype(jnp.float32)[None, :])
    b2p = b2.astype(jnp.float32)[None, :]
    return w1t, b1p, w2t, b2p


@functools.partial(jax.jit, static_argnames=("max_batch_tile",))
def linear_model_forward(x, w1t, b1p, w2t, b2p, *, max_batch_tile=512):
    """Equivalent of PyTorch: linear2(tanh(linear1(x))).  x: (B, D0) float32."""
    B, D0 = x.shape
    D0w, D1p = w1t.shape
    assert D0 == D0w, f"expected x feature dim {D0w}, got {D0}"
    D2 = w2t.shape[1]

    SUB = 8  # f32 sublane packing

    # Batch handling: pad only to the sublane multiple (<= 7 dead rows).
    Bp = _round_up(B, SUB)

    # Tile choice: big tiles amortise the ~0.35us/step overhead; once the
    # batch is big enough, use >= 2 tiles so the "parallel" axis can shard
    # across both v7x TensorCores.
    n_tiles = pl.cdiv(Bp, max_batch_tile)
    if Bp >= 256:
        n_tiles = max(n_tiles, 2)
    n_tiles = max(1, min(n_tiles, Bp // SUB))
    TB = _round_up(pl.cdiv(Bp, n_tiles), SUB)
    grid = (pl.cdiv(Bp, TB),)

    x_p = x if Bp == B else jnp.zeros((Bp, D0), x.dtype).at[:B, :].set(x)

    x_item = jnp.dtype(x.dtype).itemsize
    w_item = jnp.dtype(w1t.dtype).itemsize
    cost = pl.CostEstimate(
        flops=2 * Bp * (D0 * D1p + D1p * D2),
        transcendentals=Bp * D1p,
        bytes_accessed=int(Bp * D0 * x_item
                           + (D0 * D1p + D1p * D2) * w_item
                           + (D1p + D2) * 4
                           + Bp * D2 * 4),
    )

    # VMEM budget: double-buffered x/out tiles, (double-buffered) resident
    # weights + biases, live f32 hidden; 2x headroom, capped at 75% of the
    # generation's physical VMEM (v7x only has 64 MiB per TensorCore).
    vmem_needed = (2 * TB * D0 * x_item
                   + 2 * TB * D2 * 4
                   + 2 * (D0 * D1p + D1p * D2) * w_item
                   + 2 * (D1p + D2) * 4
                   + TB * D1p * 4)
    try:
        vmem_cap = pltpu.get_tpu_info().vmem_capacity_bytes
    except Exception:
        vmem_cap = 64 << 20  # conservative (v7x) if the query is unavailable
    vmem_limit = int(min(max(2 * vmem_needed, 8 << 20), (vmem_cap * 3) // 4))

    out = pl.pallas_call(
        _mlp_kernel,
        out_shape=jax.ShapeDtypeStruct((Bp, D2), jnp.float32),
        grid=grid,
        in_specs=[
            pl.BlockSpec((TB, D0), lambda i: (i, 0)),    # x: tiled over batch
            pl.BlockSpec((D0, D1p), lambda i: (0, 0)),   # W1: resident
            pl.BlockSpec((1, D1p), lambda i: (0, 0)),    # b1: resident
            pl.BlockSpec((D1p, D2), lambda i: (0, 0)),   # W2: resident
            pl.BlockSpec((1, D2), lambda i: (0, 0)),     # b2: resident
        ],
        out_specs=pl.BlockSpec((TB, D2), lambda i: (i, 0)),
        compiler_params=pltpu.CompilerParams(
            dimension_semantics=("parallel",),  # batch tiles across TCs (v7x)
            vmem_limit_bytes=vmem_limit,
        ),
        cost_estimate=cost,
    )(x_p, w1t, b1p, w2t, b2p)

    return out if Bp == B else out[:B, :]


def _init_linear_params(key, in_features, out_features):
    """Deterministic init mirroring nn.Linear default: U(-1/sqrt(in), 1/sqrt(in))."""
    kw, kb = jax.random.split(key)
    bound = 1.0 / (in_features ** 0.5)
    w = jax.random.uniform(kw, (out_features, in_features), jnp.float32,
                           minval=-bound, maxval=bound)
    b = jax.random.uniform(kb, (out_features,), jnp.float32,
                           minval=-bound, maxval=bound)
    return w, b


if __name__ == "__main__":
    # layers = [D0, D1, D2]
    layers = [32, 64, 16]
    batch = 8

    key = jax.random.PRNGKey(0)
    k_x, k_l1, k_l2 = jax.random.split(key, 3)

    x = jax.random.normal(k_x, (batch, layers[0]), jnp.float32)
    w1, b1 = _init_linear_params(k_l1, layers[0], layers[1])
    w2, b2 = _init_linear_params(k_l2, layers[1], layers[2])

    # Reference (pure JAX) -- same math as the PyTorch module.
    ref = jnp.tanh(x @ w1.T + b1) @ w2.T + b2

    # Exact f32 path.
    params_f32 = prepare_params(w1, b1, w2, b2, compute_dtype=jnp.float32)
    out = linear_model_forward(x, *params_f32)
    jax.block_until_ready(out)
    assert out.shape == (batch, layers[2])
    assert jnp.allclose(out, ref, atol=1e-5, rtol=1e-5)

    # bf16 MXU feed (all generations take bf16 natively); f32 accumulate,
    # f32 bias/tanh -> ~5e-2 tolerance.
    params_bf16 = prepare_params(w1, b1, w2, b2, compute_dtype=jnp.bfloat16)
    out_bf16 = linear_model_forward(x, *params_bf16)
    jax.block_until_ready(out_bf16)
    assert out_bf16.shape == (batch, layers[2])
    assert jnp.allclose(out_bf16, ref, atol=5e-2, rtol=5e-2)

    print("KERNEL_OK")
</pallas_src>

<mosaic_0001>
module attributes {stable_mosaic.version = 11 : i64} {
  func.func @_mlp_kernel(%arg0: i32, %arg1: memref<8x32xf32, #tpu.memory_space<vmem>>, %arg2: memref<32x128xf32, #tpu.memory_space<vmem>>, %arg3: memref<1x128xf32, #tpu.memory_space<vmem>>, %arg4: memref<128x16xf32, #tpu.memory_space<vmem>>, %arg5: memref<1x16xf32, #tpu.memory_space<vmem>>, %arg6: memref<8x16xf32, #tpu.memory_space<vmem>>) attributes {dimension_semantics = [#tpu.dimension_semantics<parallel>], iteration_bounds = array<i64: 1>, scalar_prefetch = 0 : i64, scratch_operands = 0 : i64, tpu.core_type = #tpu.core_type<tc>, window_params = [{transform_indices = @transform_0, window_bounds = array<i64: 8, 32>}, {pipeline_mode = #tpu.pipeline_mode<synchronous>, transform_indices = @transform_1, window_bounds = array<i64: 32, 128>}, {pipeline_mode = #tpu.pipeline_mode<synchronous>, transform_indices = @transform_2, window_bounds = array<i64: 1, 128>}, {pipeline_mode = #tpu.pipeline_mode<synchronous>, transform_indices = @transform_3, window_bounds = array<i64: 128, 16>}, {pipeline_mode = #tpu.pipeline_mode<synchronous>, transform_indices = @transform_4, window_bounds = array<i64: 1, 16>}, {transform_indices = @transform_5, window_bounds = array<i64: 8, 16>}]} {
    %c0 = arith.constant 0 : index
    %c0_0 = arith.constant 0 : index
    %0 = vector.load %arg1[%c0, %c0_0] : memref<8x32xf32, #tpu.memory_space<vmem>>, vector<8x32xf32>
    %c0_1 = arith.constant 0 : index
    %c0_2 = arith.constant 0 : index
    %1 = vector.load %arg2[%c0_1, %c0_2] : memref<32x128xf32, #tpu.memory_space<vmem>>, vector<32x128xf32>
    %cst = arith.constant dense<0.000000e+00> : vector<8x128xf32>
    %2 = tpu.matmul %0, %1, %cst {dimension_numbers = #tpu.dot_dimension_numbers<[1], [0], [0], [1], [0, 0, 1, 1], [], []>} : vector<8x32xf32>, vector<32x128xf32>, vector<8x128xf32> -> vector<8x128xf32>
    %c0_3 = arith.constant 0 : index
    %c0_4 = arith.constant 0 : index
    %3 = vector.load %arg3[%c0_3, %c0_4] : memref<1x128xf32, #tpu.memory_space<vmem>>, vector<1x128xf32>
    %4 = vector.broadcast %3 : vector<1x128xf32> to vector<8x128xf32>
    %5 = arith.addf %2, %4 : vector<8x128xf32>
    %6 = math.tanh %5 : vector<8x128xf32>
    %c0_5 = arith.constant 0 : index
    %c0_6 = arith.constant 0 : index
    %7 = vector.load %arg4[%c0_5, %c0_6] : memref<128x16xf32, #tpu.memory_space<vmem>>, vector<128x16xf32>
    %cst_7 = arith.constant dense<0.000000e+00> : vector<8x16xf32>
    %8 = tpu.matmul %6, %7, %cst_7 {dimension_numbers = #tpu.dot_dimension_numbers<[1], [0], [0], [1], [0, 0, 1, 1], [], []>} : vector<8x128xf32>, vector<128x16xf32>, vector<8x16xf32> -> vector<8x16xf32>
    %c0_8 = arith.constant 0 : index
    %c0_9 = arith.constant 0 : index
    %9 = vector.load %arg5[%c0_8, %c0_9] : memref<1x16xf32, #tpu.memory_space<vmem>>, vector<1x16xf32>
    %10 = vector.broadcast %9 : vector<1x16xf32> to vector<8x16xf32>
    %11 = arith.addf %8, %10 : vector<8x16xf32>
    %c0_10 = arith.constant 0 : index
    %c0_11 = arith.constant 0 : index
    %12 = vector.load %arg6[%c0_10, %c0_11] : memref<8x16xf32, #tpu.memory_space<vmem>>, vector<8x16xf32>
    tpu.vector_store %arg6[%c0_10, %c0_11], %11 {strides = array<i32>} : memref<8x16xf32, #tpu.memory_space<vmem>>, vector<8x16xf32>,
    return
  }
  func.func @transform_0(%arg0: i32) -> (i32, i32) {
    %c0_i32 = arith.constant 0 : i32
    %c0_i32_0 = arith.constant 0 : i32
    return %arg0, %c0_i32 : i32, i32
  }
  func.func @transform_1(%arg0: i32) -> (i32, i32) {
    %c0_i32 = arith.constant 0 : i32
    %c0_i32_0 = arith.constant 0 : i32
    %c0_i32_1 = arith.constant 0 : i32
    return %c0_i32, %c0_i32_0 : i32, i32
  }
  func.func @transform_2(%arg0: i32) -> (i32, i32) {
    %c0_i32 = arith.constant 0 : i32
    %c0_i32_0 = arith.constant 0 : i32
    %c0_i32_1 = arith.constant 0 : i32
    return %c0_i32, %c0_i32_0 : i32, i32
  }
  func.func @transform_3(%arg0: i32) -> (i32, i32) {
    %c0_i32 = arith.constant 0 : i32
    %c0_i32_0 = arith.constant 0 : i32
    %c0_i32_1 = arith.constant 0 : i32
    return %c0_i32, %c0_i32_0 : i32, i32
  }
  func.func @transform_4(%arg0: i32) -> (i32, i32) {
    %c0_i32 = arith.constant 0 : i32
    %c0_i32_0 = arith.constant 0 : i32
    %c0_i32_1 = arith.constant 0 : i32
    return %c0_i32, %c0_i32_0 : i32, i32
  }
  func.func @transform_5(%arg0: i32) -> (i32, i32) {
    %c0_i32 = arith.constant 0 : i32
    %c0_i32_0 = arith.constant 0 : i32
    return %arg0, %c0_i32 : i32, i32
  }
}

</mosaic_0001>

<llo_original>
// kernel: linear_model_forward.1
$region0: #{linear_model_forward.1}
  #allocation0 [shape = 'u32[]', space=smem, size = 0x4, offset = 0x4, fixed_abs, tag = 'smem constant byte address 0x4 - core index']
  #allocation1 [shape = 'u32[144,128]{1,0:T(1,128)}', space=vmem, size = 0x12000, scoped, tag = 'internal scratch']
  %s0 = inlined_call_operand.vmem [shape: f32[8,32], index: 0, kind: input, shape index: {}]
  %s1 = inlined_call_operand.vmem [shape: f32[32,128], index: 1, kind: input, shape index: {}]
  %s2 = inlined_call_operand.vmem [shape: f32[1,128], index: 2, kind: input, shape index: {}]
  %s3 = inlined_call_operand.vmem [shape: f32[128,16], index: 3, kind: input, shape index: {}]
  %s4 = inlined_call_operand.vmem [shape: f32[1,16], index: 4, kind: input, shape index: {}]
  %s5 = inlined_call_operand.hbm [shape: f32[8,16], index: 5, kind: output, shape index: {}]
  %s6 = sld [smem:[#allocation0]]
  $region30: #{linear_model_forward.1} parent=0
    _
  %s8 = ssub.s32 1, %s6
  %s9 = scalar_select 0, %s8, %s6
  $region1: #{linear_model_forward.1} parent=0
    #allocation2 [shape = 'u8[4096]{0}', space=vmem, size = 0x1000, scoped, tag = 'output window, operand 0, single buffered']
    #allocation3 [shape = 's32[1]{0}', space=sflag, size = 0x4, scoped, tag = 'scoped memory for linear_model_forward.1']
    %10 = vsyncpa [#allocation3], 0
    // Predicated region
    $region2: #{linear_model_forward.1} parent=1 // pred_check
      _
    $region3: #{linear_model_forward.1} parent=1 // pred_check_branch
      %12 = sbr.rel (0) target = $region5
    $region4: #{linear_model_forward.1} parent=1 // pred_region
      _
    $region5: #{linear_model_forward.1} parent=1 // pred_fallthru
      _
    // Predicated region
    $region6: #{linear_model_forward.1} parent=1 // pred_check
      _
    $region7: #{linear_model_forward.1} parent=1 // pred_check_branch
      %14 = sbr.rel (0) target = $region9
    $region8: #{linear_model_forward.1} parent=1 // pred_region
      _
    $region9: #{linear_model_forward.1} parent=1 // pred_fallthru
      _
    // Predicated region
    $region10: #{linear_model_forward.1} parent=1 // pred_check
      _
    $region11: #{linear_model_forward.1} parent=1 // pred_check_branch
      %16 = sbr.rel (0) target = $region13
    $region12: #{linear_model_forward.1} parent=1 // pred_region
      _
    $region13: #{linear_model_forward.1} parent=1 // pred_fallthru
      _
    // Predicated region
    $region14: #{linear_model_forward.1} parent=1 // pred_check
      _
    $region15: #{linear_model_forward.1} parent=1 // pred_check_branch
      %18 = sbr.rel (0) target = $region17
    $region16: #{linear_model_forward.1} parent=1 // pred_region
      _
    $region17: #{linear_model_forward.1} parent=1 // pred_fallthru
      _
    // Predicated region
    $region18: #{linear_model_forward.1} parent=1 // pred_check
      _
    $region19: #{linear_model_forward.1} parent=1 // pred_check_branch
      %20 = sbr.rel (0) target = $region21
    $region20: #{linear_model_forward.1} parent=1 // pred_region
      _
    $region21: #{linear_model_forward.1} parent=1 // pred_fallthru
      _
    %v21 = vld [vmem:[%s0] sm:$0xff]
    %v22 = vld [vmem:[%s1] sm:$0xff]
    %v23 = vld [vmem:[%s1 + $0x8] sm:$0xff]
    %v24 = vld [vmem:[%s1 + $0x10] sm:$0xff]
    %v25 = vld [vmem:[%s1 + $0x18] sm:$0xff]
    %v26 = vld [vmem:[%s2] sm:$0x1]
    %v28 = vlaneseq
    %v29 = vshrl.u32 %v28, 7
    %v30 = vsub.s32 0, %v29
    %v31 = vrot.slane %v26, %v30
    %vm33 = vcmask 261120
    %v35 = vsel %vm33, %v21, 0
    %37 = vmatprep.subr.mxu0 0.0
    %38 = vmatpush1.msra.mxu0 %v22
    %39 = vmatprep.subr.mxu0 0.0
    %40 = vmatpush1.msra.mxu0 %v23
    %41 = vmatprep.subr.mxu0 0.0
    %42 = vmatpush1.msra.mxu0 %v24
    %43 = vmatprep.subr.mxu0 0.0
    %44 = vmatpush1.msra.mxu0 %v25
    %45 = vmatprep.subr.mxu0 0.0
    %46 = vmatpush1.msra.mxu0 0.0
    %47 = vmatprep.subr.mxu0 0.0
    %48 = vmatpush1.msra.mxu0 0.0
    %49 = vmatprep.subr.mxu0 0.0
    %50 = vmatpush1.msra.mxu0 0.0
    %51 = vmatprep.subr.mxu0 0.0
    %52 = vmatpush1.msra.mxu0 0.0
    %53 = vmatprep.subr.mxu0 0.0
    %54 = vmatpush1.msra.mxu0 0.0
    %55 = vmatprep.subr.mxu0 0.0
    %56 = vmatpush1.msra.mxu0 0.0
    %57 = vmatprep.subr.mxu0 0.0
    %58 = vmatpush1.msra.mxu0 0.0
    %59 = vmatprep.subr.mxu0 0.0
    %60 = vmatpush1.msra.mxu0 0.0
    %61 = vmatprep.subr.mxu0 0.0
    %62 = vmatpush1.msra.mxu0 0.0
    %63 = vmatprep.subr.mxu0 0.0
    %64 = vmatpush1.msra.mxu0 0.0
    %65 = vmatprep.subr.mxu0 0.0
    %66 = vmatpush1.msra.mxu0 0.0
    %67 = vmatprep.subr.mxu0 0.0
    %68 = vmatpush1.msra.mxu0 0.0
    %69 = vmatprep.subr.mxu0 0.0
    %70 = vmatpush1.msra.mxu0 0.0
    %71 = vmatprep.subr.mxu0 0.0
    %72 = vmatpush1.msra.mxu0 0.0
    %73 = vmatprep.subr.mxu0 0.0
    %74 = vmatpush1.msra.mxu0 0.0
    %75 = vmatprep.subr.mxu0 0.0
    %76 = vmatpush1.msra.mxu0 0.0
    %77 = vmatprep.subr.mxu0 0.0
    %78 = vmatpush1.msra.mxu0 0.0
    %79 = vmatprep.subr.mxu0 0.0
    %80 = vmatpush1.msra.mxu0 0.0
    %81 = vmatprep.subr.mxu0 0.0
    %82 = vmatpush1.msra.mxu0 0.0
    %83 = vmatprep.subr.mxu0 0.0
    %84 = vmatpush1.msra.mxu0 0.0
    %85 = vmatprep.subr.mxu0 0.0
    %86 = vmatpush1.msra.mxu0 0.0
    %87 = vmatprep.subr.mxu0 0.0
    %88 = vmatpush1.msra.mxu0 0.0
    %89 = vmatprep.subr.mxu0 0.0
    %90 = vmatpush1.msra.mxu0 0.0
    %91 = vmatprep.subr.mxu0 0.0
    %92 = vmatpush1.msra.mxu0 0.0
    %93 = vmatprep.subr.mxu0 0.0
    %94 = vmatpush1.msra.mxu0 0.0
    %95 = vmatprep.subr.mxu0 0.0
    %96 = vmatpush1.msra.mxu0 0.0
    %97 = vmatprep.subr.mxu0 0.0
    %98 = vmatpush1.msra.mxu0 0.0
    %99 = vmatprep.subr.mxu0 0.0
    %100 = vmatpush1.msra.mxu0 0.0
    %101 = vmatprep.mubr.f32.mxu0 0.0
    %102 = vmatmul.mubr.f32.gmra.mrb[0].mxu0 %v35
    %v103 = vpop.f32.mrb[0].mxu0
    %v104 = vadd.f32 %v31, %v103
    %v105 = vpop.f32.mrb[0].mxu0
    %106 = vdwg.mxu0
    %v107 = vtanh.pop %v104
    %v108 = vld [vmem:[%s3] sm:$0xff]
    %v109 = vld [vmem:[%s3 + $0x8] sm:$0xff]
    %v110 = vld [vmem:[%s3 + $0x10] sm:$0xff]
    %v111 = vld [vmem:[%s3 + $0x18] sm:$0xff]
    %v112 = vld [vmem:[%s3 + $0x20] sm:$0xff]
    %v113 = vld [vmem:[%s3 + $0x28] sm:$0xff]
    %v114 = vld [vmem:[%s3 + $0x30] sm:$0xff]
    %v115 = vld [vmem:[%s3 + $0x38] sm:$0xff]
    %v116 = vld [vmem:[%s3 + $0x40] sm:$0xff]
    %v117 = vld [vmem:[%s3 + $0x48] sm:$0xff]
    %v118 = vld [vmem:[%s3 + $0x50] sm:$0xff]
    %v119 = vld [vmem:[%s3 + $0x58] sm:$0xff]
    %v120 = vld [vmem:[%s3 + $0x60] sm:$0xff]
    %v121 = vld [vmem:[%s3 + $0x68] sm:$0xff]
    %v122 = vld [vmem:[%s3 + $0x70] sm:$0xff]
    %v123 = vld [vmem:[%s3 + $0x78] sm:$0xff]
    %v124 = vld [vmem:[%s4] sm:$0x1]
    %v126 = vlaneseq
    %v127 = vshrl.u32 %v126, 7
    %v128 = vsub.s32 0, %v127
    %v129 = vrot.slane %v124, %v128
    %131 = vmatprep.subr.mxu0 0.0
    %132 = vmatpush1.msra.mxu0 %v108
    %133 = vmatprep.subr.mxu0 0.0
    %134 = vmatpush1.msra.mxu0 %v109
    %135 = vmatprep.subr.mxu0 0.0
    %136 = vmatpush1.msra.mxu0 %v110
    %137 = vmatprep.subr.mxu0 0.0
    %138 = vmatpush1.msra.mxu0 %v111
    %139 = vmatprep.subr.mxu0 0.0
    %140 = vmatpush1.msra.mxu0 %v112
    %141 = vmatprep.subr.mxu0 0.0
    %142 = vmatpush1.msra.mxu0 %v113
    %143 = vmatprep.subr.mxu0 0.0
    %144 = vmatpush1.msra.mxu0 %v114
    %145 = vmatprep.subr.mxu0 0.0
    %146 = vmatpush1.msra.mxu0 %v115
    %147 = vmatprep.subr.mxu0 0.0
    %148 = vmatpush1.msra.mxu0 %v116
    %149 = vmatprep.subr.mxu0 0.0
    %150 = vmatpush1.msra.mxu0 %v117
    %151 = vmatprep.subr.mxu0 0.0
    %152 = vmatpush1.msra.mxu0 %v118
    %153 = vmatprep.subr.mxu0 0.0
    %154 = vmatpush1.msra.mxu0 %v119
    %155 = vmatprep.subr.mxu0 0.0
    %156 = vmatpush1.msra.mxu0 %v120
    %157 = vmatprep.subr.mxu0 0.0
    %158 = vmatpush1.msra.mxu0 %v121
    %159 = vmatprep.subr.mxu0 0.0
    %160 = vmatpush1.msra.mxu0 %v122
    %161 = vmatprep.subr.mxu0 0.0
    %162 = vmatpush1.msra.mxu0 %v123
    %163 = vmatprep.subr.mxu0 0.0
    %164 = vmatpush1.msra.mxu0 0.0
    %165 = vmatprep.subr.mxu0 0.0
    %166 = vmatpush1.msra.mxu0 0.0
    %167 = vmatprep.subr.mxu0 0.0
    %168 = vmatpush1.msra.mxu0 0.0
    %169 = vmatprep.subr.mxu0 0.0
    %170 = vmatpush1.msra.mxu0 0.0
    %171 = vmatprep.subr.mxu0 0.0
    %172 = vmatpush1.msra.mxu0 0.0
    %173 = vmatprep.subr.mxu0 0.0
    %174 = vmatpush1.msra.mxu0 0.0
    %175 = vmatprep.subr.mxu0 0.0
    %176 = vmatpush1.msra.mxu0 0.0
    %177 = vmatprep.subr.mxu0 0.0
    %178 = vmatpush1.msra.mxu0 0.0
    %179 = vmatprep.subr.mxu0 0.0
    %180 = vmatpush1.msra.mxu0 0.0
    %181 = vmatprep.subr.mxu0 0.0
    %182 = vmatpush1.msra.mxu0 0.0
    %183 = vmatprep.subr.mxu0 0.0
    %184 = vmatpush1.msra.mxu0 0.0
    %185 = vmatprep.subr.mxu0 0.0
    %186 = vmatpush1.msra.mxu0 0.0
    %187 = vmatprep.subr.mxu0 0.0
    %188 = vmatpush1.msra.mxu0 0.0
    %189 = vmatprep.subr.mxu0 0.0
    %190 = vmatpush1.msra.mxu0 0.0
    %191 = vmatprep.subr.mxu0 0.0
    %192 = vmatpush1.msra.mxu0 0.0
    %193 = vmatprep.subr.mxu0 0.0
    %194 = vmatpush1.msra.mxu0 0.0
    %195 = vmatprep.mubr.f32.mxu0 0.0
    %196 = vmatmul.mubr.f32.gmra.mrb[0].mxu0 %v107
    %v197 = vpop.f32.mrb[0].mxu0
    %v198 = vadd.f32 %v129, %v197
    %v199 = vpop.f32.mrb[0].mxu0
    %200 = vdwg.mxu0
    %vm201 = vcmask 130048
    %202 = vst.msk [vmem:[#allocation2] sm:$0xff] %vm201, %v198
    // Predicated region
    $region22: #{linear_model_forward.1} parent=1 // pred_check
      _
    $region23: #{linear_model_forward.1} parent=1 // pred_check_branch
      %204 = sbr.rel (0) target = $region25
    $region24: #{linear_model_forward.1} parent=1 // pred_region
      %s206 = ssub.s32 128, 128
      %207 = vsyncadd [#allocation3], %s206
      %s209 = sshll.u32 [#allocation2], 4
      %s210 = int_to_ptr.vmem [resolvable:$true] %s209
      %212 = dma.vmem_to_hbm [thread:$0]  %s210, 128, %s5, [#allocation3]
    $region25: #{linear_model_forward.1} parent=1 // pred_fallthru
      _
    // Predicated region
    $region26: #{linear_model_forward.1} parent=1 // pred_check
      _
    $region27: #{linear_model_forward.1} parent=1 // pred_check_branch
      %214 = sbr.rel (0) target = $region29
    $region28: #{linear_model_forward.1} parent=1 // pred_region
      %215 = dma.done [#allocation3], 128
    $region29: #{linear_model_forward.1} parent=1 // pred_fallthru
      _
    %216 = vsyncpa [#allocation3], 1

</llo_original>
